<compile_context>
chip_gen: v7x
topology: tpu7x:2x2x1
jax: 0.10.0
libtpu: 0.0.40
codegen_flags: <defaults>
</compile_context>

<pallas_src>
import math

import jax
import jax.numpy as jnp
from jax.experimental import pallas as pl
from jax.experimental.pallas import tpu as pltpu

LANES = 128
TARGET_ROWS = 2048      # rows-per-grid-step target; 2 inputs * 2 bufs ~= 4 MiB f32


def _cdiv(a, b):
    return -(-a // b)


def _largest_divisor_le(n, cap):
    cap = max(1, min(n, cap))
    for d in range(cap, 0, -1):
        if n % d == 0:
            return d
    return 1


def _dice_partial_kernel(p_ref, t_ref, out_ref):
    """Accumulate per-channel [sum(p*t), sum(p), sum(t)] lane/sublane partials.

    p_ref, t_ref: (BN, BR, LANES) tile of one channel.
    out_ref:      (3, 8, LANES) resident accumulator for the current channel.
    """
    n = pl.program_id(1)
    r = pl.program_id(2)

    @pl.when((n == 0) & (r == 0))
    def _():
        out_ref[...] = jnp.zeros_like(out_ref)

    # Cast inside the kernel (inputs stay in their original dtype in HBM).
    p = p_ref[...].astype(jnp.float32)
    t = t_ref[...].astype(jnp.float32)

    rows = p.shape[0] * p.shape[1]          # BN * BR, multiple of 8
    p = p.reshape(rows // 8, 8, LANES)      # layout-trivial vreg grouping
    t = t.reshape(rows // 8, 8, LANES)

    # Vector accumulation: sum over whole vregs = plain VPU adds each step.
    # Cross-sublane / cross-lane reduction is deferred to the JAX epilogue.
    out_ref[0] += jnp.sum(p * t, axis=0)
    out_ref[1] += jnp.sum(p, axis=0)
    out_ref[2] += jnp.sum(t, axis=0)


def dice_channel_loss(pred, target, smooth=1e-6):
    """Pallas DiceChannelLoss.  Returns (per_channel_loss [C], avg_loss scalar)."""
    if pred.shape != target.shape:
        raise ValueError("pred and target must have the same shape")
    N, C = pred.shape[0], pred.shape[1]
    hw = math.prod(pred.shape[2:]) if len(pred.shape) > 2 else 1

    # Row layout per (n, c) slice: R rows of 128 lanes.
    R = _cdiv(hw, LANES)
    n_r_blocks = _cdiv(R, TARGET_ROWS)
    BR = _cdiv(_cdiv(R, n_r_blocks), 8) * 8         # rows per block, multiple of 8
    R_pad = BR * n_r_blocks
    padded_hw = R_pad * LANES

    # Pack several batch slices per step when spatial is small.
    BN = _largest_divisor_le(N, max(1, TARGET_ROWS // BR))

    p = pred.reshape(N, C, hw)
    t = target.reshape(N, C, hw)
    pad = padded_hw - hw
    if pad:
        # Zero padding is exactly neutral for the Dice sums (adds 0 everywhere).
        p = jnp.pad(p, ((0, 0), (0, 0), (0, pad)))
        t = jnp.pad(t, ((0, 0), (0, 0), (0, pad)))
    p4 = p.reshape(N, C, R_pad, LANES)
    t4 = t.reshape(N, C, R_pad, LANES)

    grid = (C, N // BN, n_r_blocks)

    in_spec = pl.BlockSpec((BN, None, BR, LANES), lambda c, n, r: (n, c, r, 0))
    out_spec = pl.BlockSpec((None, 3, 8, LANES), lambda c, n, r: (c, 0, 0, 0))

    partial = pl.pallas_call(
        _dice_partial_kernel,
        out_shape=jax.ShapeDtypeStruct((C, 3, 8, LANES), jnp.float32),
        grid_spec=pltpu.PrefetchScalarGridSpec(
            num_scalar_prefetch=0,
            grid=grid,
            in_specs=[in_spec, in_spec],
            out_specs=out_spec,
        ),
        compiler_params=pltpu.CompilerParams(
            dimension_semantics=("parallel", "arbitrary", "arbitrary")),
    )(p4, t4)

    # Tiny epilogue in plain JAX: reduce partials, dice formula, channel mean.
    sums = partial.sum(axis=(2, 3))                 # (C, 3)
    intersection = sums[:, 0]
    union = sums[:, 1] + sums[:, 2]
    dice = (2.0 * intersection + smooth) / (union + smooth)
    per_channel = 1.0 - dice
    return per_channel, jnp.mean(per_channel)


def _dice_ref(pred, target, smooth=1e-6):
    N, C = pred.shape[0], pred.shape[1]
    p = pred.astype(jnp.float32).reshape(N, C, -1)
    t = target.astype(jnp.float32).reshape(N, C, -1)
    inter = jnp.sum(p * t, axis=(0, 2))
    union = jnp.sum(p, axis=(0, 2)) + jnp.sum(t, axis=(0, 2))
    dice = (2.0 * inter + smooth) / (union + smooth)
    per = 1.0 - dice
    return per, jnp.mean(per)


if __name__ == "__main__":
    key = jax.random.PRNGKey(0)
    k1, k2 = jax.random.split(key)
    shape = (2, 4, 16, 16)                                   # NCHW
    pred = jax.random.uniform(k1, shape, dtype=jnp.float32)  # "probabilities"
    target = (jax.random.uniform(k2, shape) > 0.5).astype(jnp.float32)

    per_channel, avg = dice_channel_loss(pred, target)
    per_channel = jax.block_until_ready(per_channel)
    avg = jax.block_until_ready(avg)

    ref_per, ref_avg = _dice_ref(pred, target)
    assert jnp.allclose(per_channel, ref_per, rtol=1e-5, atol=1e-6), (per_channel, ref_per)
    assert jnp.allclose(avg, ref_avg, rtol=1e-5, atol=1e-6), (avg, ref_avg)
    print("KERNEL_OK")
</pallas_src>

<mosaic_0001>
module attributes {stable_mosaic.version = 11 : i64} {
  func.func @_dice_partial_kernel(%arg0: i32, %arg1: i32, %arg2: i32, %arg3: memref<2x1x8x128xf32, #tpu.memory_space<vmem>>, %arg4: memref<2x1x8x128xf32, #tpu.memory_space<vmem>>, %arg5: memref<1x3x8x128xf32, #tpu.memory_space<vmem>>) attributes {dimension_semantics = [#tpu.dimension_semantics<parallel>, #tpu.dimension_semantics<arbitrary>, #tpu.dimension_semantics<arbitrary>], iteration_bounds = array<i64: 4, 1, 1>, scalar_prefetch = 0 : i64, scratch_operands = 0 : i64, tpu.core_type = #tpu.core_type<tc>, window_params = [{transform_indices = @transform_0, window_bounds = array<i64: 2, 1, 8, 128>}, {transform_indices = @transform_1, window_bounds = array<i64: 2, 1, 8, 128>}, {transform_indices = @transform_2, window_bounds = array<i64: 1, 3, 8, 128>}]} {
    %c0_i32 = arith.constant 0 : i32
    %0 = arith.cmpi eq, %arg1, %c0_i32 : i32
    %c0_i32_0 = arith.constant 0 : i32
    %1 = arith.cmpi eq, %arg2, %c0_i32_0 : i32
    %2 = arith.andi %0, %1 : i1
    %3 = arith.extui %2 : i1 to i32
    %c0_i32_1 = arith.constant 0 : i32
    %4 = arith.cmpi ne, %3, %c0_i32_1 : i32
    scf.if %4 {
      %cst_33 = arith.constant 0.000000e+00 : f32
      %31 = vector.broadcast %cst_33 : f32 to vector<3x8x128xf32>
      %c0_34 = arith.constant 0 : index
      %c0_35 = arith.constant 0 : index
      %c0_36 = arith.constant 0 : index
      %c0_37 = arith.constant 0 : index
      %32 = vector.load %arg5[%c0_34, %c0_35, %c0_36, %c0_37] : memref<1x3x8x128xf32, #tpu.memory_space<vmem>>, vector<1x3x8x128xf32>
      %33 = vector.shape_cast %32 : vector<1x3x8x128xf32> to vector<3x8x128xf32>
      %34 = vector.shape_cast %31 : vector<3x8x128xf32> to vector<1x3x8x128xf32>
      tpu.vector_store %arg5[%c0_34, %c0_35, %c0_36, %c0_37], %34 {strides = array<i32>} : memref<1x3x8x128xf32, #tpu.memory_space<vmem>>, vector<1x3x8x128xf32>,
    } else {
    }
    %c0 = arith.constant 0 : index
    %c0_2 = arith.constant 0 : index
    %c0_3 = arith.constant 0 : index
    %c0_4 = arith.constant 0 : index
    %5 = vector.load %arg3[%c0, %c0_2, %c0_3, %c0_4] : memref<2x1x8x128xf32, #tpu.memory_space<vmem>>, vector<2x1x8x128xf32>
    %6 = vector.shape_cast %5 : vector<2x1x8x128xf32> to vector<2x8x128xf32>
    %c0_5 = arith.constant 0 : index
    %c0_6 = arith.constant 0 : index
    %c0_7 = arith.constant 0 : index
    %c0_8 = arith.constant 0 : index
    %7 = vector.load %arg4[%c0_5, %c0_6, %c0_7, %c0_8] : memref<2x1x8x128xf32, #tpu.memory_space<vmem>>, vector<2x1x8x128xf32>
    %8 = vector.shape_cast %7 : vector<2x1x8x128xf32> to vector<2x8x128xf32>
    %c0_9 = arith.constant 0 : index
    %c0_10 = arith.constant 0 : index
    %c0_11 = arith.constant 0 : index
    %c0_12 = arith.constant 0 : index
    %9 = vector.load %arg5[%c0_9, %c0_10, %c0_11, %c0_12] : memref<1x3x8x128xf32, #tpu.memory_space<vmem>>, vector<1x1x8x128xf32>
    %10 = vector.shape_cast %9 : vector<1x1x8x128xf32> to vector<8x128xf32>
    %11 = arith.mulf %6, %8 : vector<2x8x128xf32>
    %cst = arith.constant dense<0.000000e+00> : vector<8x128xf32>
    %12 = vector.multi_reduction <add>, %11, %cst [0] : vector<2x8x128xf32> to vector<8x128xf32>
    %13 = arith.addf %10, %12 : vector<8x128xf32>
    %c0_13 = arith.constant 0 : index
    %c0_14 = arith.constant 0 : index
    %c0_15 = arith.constant 0 : index
    %c0_16 = arith.constant 0 : index
    %14 = vector.load %arg5[%c0_13, %c0_14, %c0_15, %c0_16] : memref<1x3x8x128xf32, #tpu.memory_space<vmem>>, vector<1x1x8x128xf32>
    %15 = vector.shape_cast %14 : vector<1x1x8x128xf32> to vector<8x128xf32>
    %16 = vector.shape_cast %13 : vector<8x128xf32> to vector<1x1x8x128xf32>
    tpu.vector_store %arg5[%c0_13, %c0_14, %c0_15, %c0_16], %16 {strides = array<i32>} : memref<1x3x8x128xf32, #tpu.memory_space<vmem>>, vector<1x1x8x128xf32>,
    %c0_17 = arith.constant 0 : index
    %c1 = arith.constant 1 : index
    %c0_18 = arith.constant 0 : index
    %c0_19 = arith.constant 0 : index
    %17 = vector.load %arg5[%c0_17, %c1, %c0_18, %c0_19] : memref<1x3x8x128xf32, #tpu.memory_space<vmem>>, vector<1x1x8x128xf32>
    %18 = vector.shape_cast %17 : vector<1x1x8x128xf32> to vector<8x128xf32>
    %cst_20 = arith.constant dense<0.000000e+00> : vector<8x128xf32>
    %19 = vector.multi_reduction <add>, %6, %cst_20 [0] : vector<2x8x128xf32> to vector<8x128xf32>
    %20 = arith.addf %18, %19 : vector<8x128xf32>
    %c0_21 = arith.constant 0 : index
    %c1_22 = arith.constant 1 : index
    %c0_23 = arith.constant 0 : index
    %c0_24 = arith.constant 0 : index
    %21 = vector.load %arg5[%c0_21, %c1_22, %c0_23, %c0_24] : memref<1x3x8x128xf32, #tpu.memory_space<vmem>>, vector<1x1x8x128xf32>
    %22 = vector.shape_cast %21 : vector<1x1x8x128xf32> to vector<8x128xf32>
    %23 = vector.shape_cast %20 : vector<8x128xf32> to vector<1x1x8x128xf32>
    tpu.vector_store %arg5[%c0_21, %c1_22, %c0_23, %c0_24], %23 {strides = array<i32>} : memref<1x3x8x128xf32, #tpu.memory_space<vmem>>, vector<1x1x8x128xf32>,
    %c0_25 = arith.constant 0 : index
    %c2 = arith.constant 2 : index
    %c0_26 = arith.constant 0 : index
    %c0_27 = arith.constant 0 : index
    %24 = vector.load %arg5[%c0_25, %c2, %c0_26, %c0_27] : memref<1x3x8x128xf32, #tpu.memory_space<vmem>>, vector<1x1x8x128xf32>
    %25 = vector.shape_cast %24 : vector<1x1x8x128xf32> to vector<8x128xf32>
    %cst_28 = arith.constant dense<0.000000e+00> : vector<8x128xf32>
    %26 = vector.multi_reduction <add>, %8, %cst_28 [0] : vector<2x8x128xf32> to vector<8x128xf32>
    %27 = arith.addf %25, %26 : vector<8x128xf32>
    %c0_29 = arith.constant 0 : index
    %c2_30 = arith.constant 2 : index
    %c0_31 = arith.constant 0 : index
    %c0_32 = arith.constant 0 : index
    %28 = vector.load %arg5[%c0_29, %c2_30, %c0_31, %c0_32] : memref<1x3x8x128xf32, #tpu.memory_space<vmem>>, vector<1x1x8x128xf32>
    %29 = vector.shape_cast %28 : vector<1x1x8x128xf32> to vector<8x128xf32>
    %30 = vector.shape_cast %27 : vector<8x128xf32> to vector<1x1x8x128xf32>
    tpu.vector_store %arg5[%c0_29, %c2_30, %c0_31, %c0_32], %30 {strides = array<i32>} : memref<1x3x8x128xf32, #tpu.memory_space<vmem>>, vector<1x1x8x128xf32>,
    return
  }
  func.func @transform_0(%arg0: i32, %arg1: i32, %arg2: i32) -> (i32, i32, i32, i32) {
    %c0_i32 = arith.constant 0 : i32
    %c0_i32_0 = arith.constant 0 : i32
    return %arg1, %arg0, %arg2, %c0_i32 : i32, i32, i32, i32
  }
  func.func @transform_1(%arg0: i32, %arg1: i32, %arg2: i32) -> (i32, i32, i32, i32) {
    %c0_i32 = arith.constant 0 : i32
    %c0_i32_0 = arith.constant 0 : i32
    return %arg1, %arg0, %arg2, %c0_i32 : i32, i32, i32, i32
  }
  func.func @transform_2(%arg0: i32, %arg1: i32, %arg2: i32) -> (i32, i32, i32, i32) {
    %c0_i32 = arith.constant 0 : i32
    %c0_i32_0 = arith.constant 0 : i32
    %c0_i32_1 = arith.constant 0 : i32
    %c0_i32_2 = arith.constant 0 : i32
    return %arg0, %c0_i32, %c0_i32_0, %c0_i32_1 : i32, i32, i32, i32
  }
}

</mosaic_0001>

<llo_original>
// kernel: tpu_custom_call.1
$region0: #{tpu_custom_call.1}
  #allocation0 [shape = 'u32[]', space=smem, size = 0x4, offset = 0x4, fixed_abs, tag = 'smem constant byte address 0x4 - core index']
  #allocation1 [shape = 'u32[144,128]{1,0:T(1,128)}', space=vmem, size = 0x12000, scoped, tag = 'internal scratch']
  %s0 = inlined_call_operand.hbm [shape: f32[2,4,8,128], index: 0, kind: input, shape index: {}]
  %s1 = inlined_call_operand.hbm [shape: f32[2,4,8,128], index: 1, kind: input, shape index: {}]
  %s2 = inlined_call_operand.hbm [shape: f32[4,3,8,128], index: 2, kind: output, shape index: {}]
  %s3 = sld [smem:[#allocation0]]
  $region53: #{tpu_custom_call.1} parent=0
    _
  %s5 = ssub.s32 1, %s3
  %s6 = scalar_select 0, %s5, %s3
  $region1: #{tpu_custom_call.1} parent=0
    #allocation2 [shape = 'u8[16384]{0}', space=vmem, size = 0x4000, scoped, tag = 'input window, operand 0']
    #allocation3 [shape = 's32[2]{0}', space=sflag, size = 0x8, scoped, tag = 'scoped memory for tpu_custom_call.1']
    #allocation4 [shape = 's32[2]{0}', space=sflag, size = 0x8, scoped, tag = 'scoped memory for tpu_custom_call.1']
    #allocation5 [shape = 'u8[16384]{0}', space=vmem, size = 0x4000, scoped, tag = 'input window, operand 1']
    #allocation6 [shape = 's32[2]{0}', space=sflag, size = 0x8, scoped, tag = 'scoped memory for tpu_custom_call.1']
    #allocation7 [shape = 'u8[24576]{0}', space=vmem, size = 0x6000, scoped, tag = 'output window, operand 0']
    %7 = vsyncpa [#allocation3], 0
    %s8 = scalar_lea.sflag [#allocation3], 1
    %9 = vsyncpa %s8, 0
    %10 = vsyncpa [#allocation6], 0
    %s11 = scalar_lea.sflag [#allocation6], 1
    %12 = vsyncpa %s11, 0
    %13 = vsyncpa [#allocation4], 0
    %s14 = scalar_lea.sflag [#allocation4], 1
    %15 = vsyncpa %s14, 0
    loop: start=0, step=1, limit=6
    $region2: #{tpu_custom_call.1} parent=1 // loop_pre_header
      _
    $region3: #{tpu_custom_call.1} parent=1 // loop_header
      %s17 = sphi 0, %s21
      %p18 = scmp.ge.s32.totalorder %s17, 6
      %s24 = sphi 0, %s43
      %s25 = sphi 0, %s39
      %s26 = sphi 0, %s35
      %s27 = sphi 0, %s24
      %s28 = sphi 0, %s25
      %s29 = sphi 0, %s26
      %s30 = sphi 0, %s27
      %s31 = sphi 0, %s28
      %s32 = sphi 0, %s29
      %s50 = sphi 0, %s52
      %s53 = sphi 0, %s50
      %s54 = sphi 0, %s53
      %s70 = sphi 0, %s54
      %s80 = sphi 0, %s82
      %s83 = sphi 0, %s80
      %s84 = sphi 0, %s83
      %s100 = sphi 0, %s84
      %s106 = sphi 0, %s108
      %s109 = sphi 0, %s106
      %s110 = sphi 0, %s109
      %s126 = sphi 0, %s110
    $region4: #{tpu_custom_call.1} parent=1 // loop_header_branch
      %20 = sbr.rel (%p18) target = $region8
    $region5: #{tpu_custom_call.1} parent=1 // loop_body
      %s22 = ssub.s32 %s17, 1
      %s23 = ssub.s32 %s17, 2
      %s33 = sadd.s32 1, %s26
      %p34 = scmp.ge.s32.totalorder %s33, 1
      %s35 = scalar_select %p34, 0, %s33
      %s36 = sadd.s32 1, %s25
      %s37 = scalar_select %p34, %s36, %s25
      %p38 = scmp.ge.s32.totalorder %s37, 1
      %s39 = scalar_select %p38, 0, %s37
      %s40 = sadd.s32 1, %s24
      %s41 = scalar_select %p38, %s40, %s24
      %p42 = scmp.ge.s32.totalorder %s41, 4
      %s43 = scalar_select %p42, 0, %s41
      %s44 = ssub.s32 %s25, %s39
      %s45 = ssub.s32 %s24, %s43
      %s46 = sor.u32 %s44, %s45
      %s47 = ssub.s32 %s26, %s35
      %s48 = sor.u32 %s46, %s47
      %p49 = scmp.eq.s32.totalorder %s48, 0
      %s51 = sadd.s32 %s50, 1
      %s52 = scalar_select %p49, %s50, %s51
      %p55 = pneg %p49
      %p56 = scmp.eq.s32.totalorder %s17, 3
      %p57 = por %p55, %p56
      %p58 = scmp.ne.s32.totalorder %s50, %s53
      %p59 = scmp.eq.s32.totalorder %s17, 0
      %p60 = por %p58, %p59
      %p61 = scmp.ne.s32.totalorder %s50, %s53
      %p62 = scmp.eq.s32.totalorder %s22, 3
      %p63 = por %p61, %p62
      %p64 = scmp.ne.s32.totalorder %s53, %s54
      %p65 = scmp.eq.s32.totalorder %s22, 0
      %p66 = por %p64, %p65
      %p67 = scmp.ne.s32.totalorder %s53, %s54
      %p68 = scmp.eq.s32.totalorder %s23, 3
      %p69 = por %p67, %p68
      %p71 = scmp.ne.s32.totalorder %s54, %s70
      %p72 = scmp.eq.s32.totalorder %s23, 0
      %p73 = por %p71, %p72
      %s74 = ssub.s32 %s25, %s39
      %s75 = ssub.s32 %s24, %s43
      %s76 = sor.u32 %s74, %s75
      %s77 = ssub.s32 %s26, %s35
      %s78 = sor.u32 %s76, %s77
      %p79 = scmp.eq.s32.totalorder %s78, 0
      %s81 = sadd.s32 %s80, 1
      %s82 = scalar_select %p79, %s80, %s81
      %p85 = pneg %p79
      %p86 = scmp.eq.s32.totalorder %s17, 3
      %p87 = por %p85, %p86
      %p88 = scmp.ne.s32.totalorder %s80, %s83
      %p89 = scmp.eq.s32.totalorder %s17, 0
      %p90 = por %p88, %p89
      %p91 = scmp.ne.s32.totalorder %s80, %s83
      %p92 = scmp.eq.s32.totalorder %s22, 3
      %p93 = por %p91, %p92
      %p94 = scmp.ne.s32.totalorder %s83, %s84
      %p95 = scmp.eq.s32.totalorder %s22, 0
      %p96 = por %p94, %p95
      %p97 = scmp.ne.s32.totalorder %s83, %s84
      %p98 = scmp.eq.s32.totalorder %s23, 3
      %p99 = por %p97, %p98
      %p101 = scmp.ne.s32.totalorder %s84, %s100
      %p102 = scmp.eq.s32.totalorder %s23, 0
      %p103 = por %p101, %p102
      %s104 = ssub.s32 %s24, %s43
      %p105 = scmp.eq.s32.totalorder %s104, 0
      %s107 = sadd.s32 %s106, 1
      %s108 = scalar_select %p105, %s106, %s107
      %p111 = pneg %p105
      %p112 = scmp.eq.s32.totalorder %s17, 3
      %p113 = por %p111, %p112
      %p114 = scmp.ne.s32.totalorder %s106, %s109
      %p115 = scmp.eq.s32.totalorder %s17, 0
      %p116 = por %p114, %p115
      %p117 = scmp.ne.s32.totalorder %s106, %s109
      %p118 = scmp.eq.s32.totalorder %s22, 3
      %p119 = por %p117, %p118
      %p120 = scmp.ne.s32.totalorder %s109, %s110
      %p121 = scmp.eq.s32.totalorder %s22, 0
      %p122 = por %p120, %p121
      %p123 = scmp.ne.s32.totalorder %s109, %s110
      %p124 = scmp.eq.s32.totalorder %s23, 3
      %p125 = por %p123, %p124
      %p127 = scmp.ne.s32.totalorder %s110, %s126
      %p128 = scmp.eq.s32.totalorder %s23, 0
      %p129 = por %p127, %p128
      %p130 = scmp.le.s32.totalorder 1, %s17
      %p131 = scmp.lt.s32.totalorder %s17, 5
      %p132 = pnand %p130, %p131
      %p133 = pneg %p132
      // Predicated region
      $region9: #{tpu_custom_call.1} parent=5 // pred_check
        _
      $region10: #{tpu_custom_call.1} parent=5 // pred_check_branch
        %135 = sbr.rel (%p132) target = $region12
      $region11: #{tpu_custom_call.1} parent=5 // pred_region
        %s136 = ssub.s32 %s17, 1
      $region12: #{tpu_custom_call.1} parent=5 // pred_fallthru
        _
      %p137 = scmp.lt.s32.totalorder %s17, 4
      // Predicated region
      $region13: #{tpu_custom_call.1} parent=5 // pred_check
        %p138 = pneg %p137
      $region14: #{tpu_custom_call.1} parent=5 // pred_check_branch
        %140 = sbr.rel (%p138) target = $region16
      $region15: #{tpu_custom_call.1} parent=5 // pred_region
        // Predicated region
        $region17: #{tpu_custom_call.1} parent=15 // pred_check
          %p141 = pneg %p60
        $region18: #{tpu_custom_call.1} parent=15 // pred_check_branch
          %143 = sbr.rel (%p141) target = $region20
        $region19: #{tpu_custom_call.1} parent=15 // pred_region
          %s144 = sand.u32 %s50, 1
          %s145 = scalar_lea.sflag [#allocation3], %s144
          %s146 = sand.u32 %s50, 1
          %s147 = smul.addr %s146, 16
          %s148 = scalar_lea.vmem [#allocation2], %s147
          %s149 = smul.u32 2, %s25
          %s151 = ssub.s32 256, 256
          %152 = vsyncadd %s145, %s151
          %s153 = sadd.s32 %s26, %s24
          %s154 = smul.addr %s149, 4
          %s155 = sadd.s32 %s153, %s154
          %s156 = smul.addr %s155, 128
          %s157 = scalar_lea.hbm %s0, %s156
          %s158 = sshll.u32 %s148, 4
          %s159 = int_to_ptr.vmem [resolvable:$true] %s158
          %164 = dma.hbm_to_vmem [thread:$0]  %s157, 256, %s159, %s145, 512, 128, 8
        $region20: #{tpu_custom_call.1} parent=15 // pred_fallthru
          _
        // Predicated region
        $region21: #{tpu_custom_call.1} parent=15 // pred_check
          %p165 = pneg %p90
        $region22: #{tpu_custom_call.1} parent=15 // pred_check_branch
          %167 = sbr.rel (%p165) target = $region24
        $region23: #{tpu_custom_call.1} parent=15 // pred_region
          %s168 = sand.u32 %s80, 1
          %s169 = scalar_lea.sflag [#allocation6], %s168
          %s170 = sand.u32 %s80, 1
          %s171 = smul.addr %s170, 16
          %s172 = scalar_lea.vmem [#allocation5], %s171
          %s173 = smul.u32 2, %s25
          %s175 = ssub.s32 256, 256
          %176 = vsyncadd %s169, %s175
          %s177 = sadd.s32 %s26, %s24
          %s178 = smul.addr %s173, 4
          %s179 = sadd.s32 %s177, %s178
          %s180 = smul.addr %s179, 128
          %s181 = scalar_lea.hbm %s1, %s180
          %s182 = sshll.u32 %s172, 4
          %s183 = int_to_ptr.vmem [resolvable:$true] %s182
          %188 = dma.hbm_to_vmem [thread:$0]  %s181, 256, %s183, %s169, 512, 128, 8
        $region24: #{tpu_custom_call.1} parent=15 // pred_fallthru
          _
      $region16: #{tpu_custom_call.1} parent=5 // pred_fallthru
        _
      %p189 = scmp.le.s32.totalorder 1, %s17
      %p190 = scmp.lt.s32.totalorder %s17, 5
      %p191 = pnand %p189, %p190
      %p192 = pneg %p191
      // Predicated region
      $region25: #{tpu_custom_call.1} parent=5 // pred_check
        _
      $region26: #{tpu_custom_call.1} parent=5 // pred_check_branch
        %194 = sbr.rel (%p191) target = $region28
      $region27: #{tpu_custom_call.1} parent=5 // pred_region
        %s195 = ssub.s32 %s17, 1
        %s196 = sand.u32 %s53, 1
        %s197 = scalar_lea.sflag [#allocation3], %s196
        %s198 = sand.u32 %s53, 1
        %s199 = smul.addr %s198, 16
        %s200 = scalar_lea.vmem [#allocation2], %s199
        // Predicated region
        $region29: #{tpu_custom_call.1} parent=27 // pred_check
          %p201 = pneg %p66
        $region30: #{tpu_custom_call.1} parent=27 // pred_check_branch
          %203 = sbr.rel (%p201) target = $region32
        $region31: #{tpu_custom_call.1} parent=27 // pred_region
          %204 = dma.done %s197, 256
        $region32: #{tpu_custom_call.1} parent=27 // pred_fallthru
          _
        %s205 = sand.u32 %s83, 1
        %s206 = scalar_lea.sflag [#allocation6], %s205
        %s207 = sand.u32 %s83, 1
        %s208 = smul.addr %s207, 16
        %s209 = scalar_lea.vmem [#allocation5], %s208
        // Predicated region
        $region33: #{tpu_custom_call.1} parent=27 // pred_check
          %p210 = pneg %p96
        $region34: #{tpu_custom_call.1} parent=27 // pred_check_branch
          %212 = sbr.rel (%p210) target = $region36
        $region35: #{tpu_custom_call.1} parent=27 // pred_region
          %213 = dma.done %s206, 256
        $region36: #{tpu_custom_call.1} parent=27 // pred_fallthru
          _
        %s214 = sand.u32 %s53, 1
        %s215 = scalar_lea.sflag [#allocation3], %s214
        %s216 = sand.u32 %s53, 1
        %s217 = smul.addr %s216, 16
        %s218 = scalar_lea.vmem [#allocation2], %s217
        %p219 = pneg %p66
        %p220 = pneg %p63
        %s221 = sand.u32 %s83, 1
        %s222 = scalar_lea.sflag [#allocation6], %s221
        %s223 = sand.u32 %s83, 1
        %s224 = smul.addr %s223, 16
        %s225 = scalar_lea.vmem [#allocation5], %s224
        %p226 = pneg %p96
        %p227 = pneg %p93
        %p228 = pneg %p122
        %p229 = pneg %p119
        %s230 = sand.u32 %s109, 1
        %s231 = scalar_lea.sflag [#allocation4], %s230
        %s232 = sand.u32 %s109, 1
        %s233 = smul.addr %s232, 24
        %s234 = scalar_lea.vmem [#allocation7], %s233
        %s235 = smul.u32 2, %s28
        %s236 = smul.u32 2, %s28
        %p237 = scmp.eq.s32.totalorder %s28, 0
        %p238 = scmp.eq.s32.totalorder %s29, 0
        %p239 = pnand %p237, %p238
        %p240 = pneg %p239
        // Predicated region
        $region37: #{tpu_custom_call.1} parent=27 // pred_check
          _
        $region38: #{tpu_custom_call.1} parent=27 // pred_check_branch
          %242 = sbr.rel (%p239) target = $region40
        $region39: #{tpu_custom_call.1} parent=27 // pred_region
          %243 = vst [vmem:[%s234] sm:$0xff] 0.0
          %244 = vst [vmem:[%s234 + $0x8] sm:$0xff] 0.0
          %245 = vst [vmem:[%s234 + $0x10] sm:$0xff] 0.0
        $region40: #{tpu_custom_call.1} parent=27 // pred_fallthru
          _
        %v246 = vld [vmem:[%s200] sm:$0xff]
        %v247 = vld [vmem:[%s200 + $0x8] sm:$0xff]
        %v248 = vld [vmem:[%s209] sm:$0xff]
        %v249 = vld [vmem:[%s209 + $0x8] sm:$0xff]
        %v250 = vld [vmem:[%s234] sm:$0xff]
        %v251 = vmul.f32 %v246, %v248
        %v252 = vmul.f32 %v247, %v249
        %v253 = vadd.f32 %v251, %v252
        %v254 = vadd.f32 %v250, %v253
        %255 = vst [vmem:[%s234] sm:$0xff] %v254
        %s256 = scalar_lea.vmem %s234, 8 [#allocation7]
        %v257 = vld [vmem:[%s256] sm:$0xff]
        %v258 = vadd.f32 %v246, %v247
        %v259 = vadd.f32 %v257, %v258
        %260 = vst [vmem:[%s256] sm:$0xff] %v259
        %s261 = scalar_lea.vmem %s234, 16 [#allocation7]
        %v262 = vld [vmem:[%s261] sm:$0xff]
        %v263 = vadd.f32 %v248, %v249
        %v264 = vadd.f32 %v262, %v263
        %265 = vst [vmem:[%s261] sm:$0xff] %v264
        %s266 = sand.u32 %s109, 1
        %s267 = scalar_lea.sflag [#allocation4], %s266
        %s268 = sand.u32 %s109, 1
        %s269 = smul.addr %s268, 24
        %s270 = scalar_lea.vmem [#allocation7], %s269
        // Predicated region
        $region41: #{tpu_custom_call.1} parent=27 // pred_check
          %p271 = pneg %p119
        $region42: #{tpu_custom_call.1} parent=27 // pred_check_branch
          %273 = sbr.rel (%p271) target = $region44
        $region43: #{tpu_custom_call.1} parent=27 // pred_region
          %s275 = ssub.s32 384, 384
          %276 = vsyncadd %s267, %s275
          %s277 = smul.addr %s27, 3
          %s278 = smul.addr %s277, 128
          %s279 = scalar_lea.hbm %s2, %s278
          %s280 = sshll.u32 %s270, 4
          %s281 = int_to_ptr.vmem [resolvable:$true] %s280
          %286 = dma.vmem_to_hbm [thread:$0]  %s281, 384, %s279, %s267, 128, 128, 8
        $region44: #{tpu_custom_call.1} parent=27 // pred_fallthru
          _
      $region28: #{tpu_custom_call.1} parent=5 // pred_fallthru
        _
      %p287 = scmp.le.s32.totalorder 2, %s17
      // Predicated region
      $region45: #{tpu_custom_call.1} parent=5 // pred_check
        %p288 = pneg %p287
      $region46: #{tpu_custom_call.1} parent=5 // pred_check_branch
        %290 = sbr.rel (%p288) target = $region48
      $region47: #{tpu_custom_call.1} parent=5 // pred_region
        %s291 = ssub.s32 %s17, 2
        // Predicated region
        $region49: #{tpu_custom_call.1} parent=47 // pred_check
          %p292 = pneg %p125
        $region50: #{tpu_custom_call.1} parent=47 // pred_check_branch
          %294 = sbr.rel (%p292) target = $region52
        $region51: #{tpu_custom_call.1} parent=47 // pred_region
          %s295 = sand.u32 %s110, 1
          %s296 = scalar_lea.sflag [#allocation4], %s295
          %s297 = sand.u32 %s110, 1
          %s298 = smul.addr %s297, 24
          %s299 = scalar_lea.vmem [#allocation7], %s298
          %300 = dma.done %s296, 384
        $region52: #{tpu_custom_call.1} parent=47 // pred_fallthru
          _
      $region48: #{tpu_custom_call.1} parent=5 // pred_fallthru
        _
    $region6: #{tpu_custom_call.1} parent=1 // loop_footer
      %s21 = sadd.s32 1, %s17
    $region7: #{tpu_custom_call.1} parent=1 // loop_footer_branch
      %16 = sbr.rel target = $region3
    $region8: #{tpu_custom_call.1} parent=1 // loop_exit
      _
    %301 = vsyncpa [#allocation3], 1
    %s302 = scalar_lea.sflag [#allocation3], 1
    %303 = vsyncpa %s302, 1
    %304 = vsyncpa [#allocation6], 1
    %s305 = scalar_lea.sflag [#allocation6], 1
    %306 = vsyncpa %s305, 1
    %307 = vsyncpa [#allocation4], 1
    %s308 = scalar_lea.sflag [#allocation4], 1
    %309 = vsyncpa %s308, 1

</llo_original>
